<compile_context>
chip_gen: v6e
topology: v6e:2x2x1
jax: 0.10.0
libtpu: 0.0.40
codegen_flags: <defaults>
</compile_context>

<pallas_src>
import functools

import jax
import jax.numpy as jnp
from jax import lax
from jax.experimental import pallas as pl
from jax.experimental.pallas import tpu as pltpu

NUM_CATEGORIES = 11
LANES = 128
CHUNK_ROWS = 128            # rows per register-resident inner-loop step
PAD_LOGIT = -1e9            # softplus(-1e9) == 0 -> zero loss contribution

# Class frequencies from the module __init__ (only feed the unused `weight`
# attribute in the PyTorch forward; kept for parity/documentation).
FREQ = jnp.array(
    [0.09996133 * 1.25, 0.16854454, 0.20569808, 0.08781746 * 1.25,
     0.09604228 * 1.25, 0.09111779 * 1.25, 0.21371664, 0.13064329 * 1.25,
     0.38365347 / 1.5, 0.49544927 / 1.5, 0.08578059 * 1.25],
    dtype=jnp.float32,
)


def _tpu_tile_config():
    """(max_tile_rows, vmem_limit_bytes) per TPU generation."""
    try:
        kind = jax.devices()[0].device_kind.lower()
    except Exception:  # unknown backend -> conservative defaults
        kind = ""
    if "7" in kind:
        # v7x: 64 MiB physical VMEM, 2 TensorCores -> smaller tiles, >=2 steps.
        return 4096, 32 * 1024 * 1024
    # v4/v5e/v5p/v6e: 128 MiB physical VMEM; big tiles amortize per-step cost.
    # (explicit raise needed on v5e whose scoped default is only 16 MiB)
    return 8192, 64 * 1024 * 1024


def _overall_bce_kernel(pred_ref, target_ref, out_ref, *, valid_rows,
                        chunk_rows, compute_dtype):
    """(tile_rows,128) logits/targets -> (1,1,128) partial BCE sums (f32)."""
    tile_rows = pred_ref.shape[0]
    n_chunks = tile_rows // chunk_rows          # static; chunk_rows divides tile
    tile_row0 = pl.program_id(0) * tile_rows

    # Hoisted constants (JAX does not CSE broadcasts inside the loop).
    row_iota = lax.broadcasted_iota(jnp.int32, (chunk_rows, LANES), 0)
    one = jnp.asarray(1.0, compute_dtype)
    clamp = jnp.asarray(100.0, compute_dtype)   # PyTorch clamps -log terms at 100

    def body(c, acc):
        r0 = pl.multiple_of(c * chunk_rows, chunk_rows)
        x = pred_ref[pl.ds(r0, chunk_rows), :].astype(compute_dtype)
        t = target_ref[pl.ds(r0, chunk_rows), :].astype(compute_dtype)

        # Stable BCE-with-logits: one exp + one log1p per element (EUP slot).
        #   -log(1 - sigmoid(x)) = softplus(x)  = max(x,0) + log1p(exp(-|x|))
        #   -log(sigmoid(x))     = softplus(-x) = softplus(x) - x
        lg = jnp.log1p(jnp.exp(-jnp.abs(x)))
        sp_pos = jnp.maximum(x, 0) + lg
        sp_neg = sp_pos - x
        loss = (t * jnp.minimum(sp_neg, clamp)
                + (one - t) * jnp.minimum(sp_pos, clamp))

        # Mask rows past the real data (grid overhang garbage).  Select, not
        # multiply, so NaN/inf in undefined rows never reaches the sum.
        valid = (tile_row0 + c * chunk_rows + row_iota) < valid_rows
        loss = jnp.where(valid, loss.astype(jnp.float32), 0.0)

        return acc + jnp.sum(loss, axis=0, keepdims=True)

    unroll = True if n_chunks <= 8 else 8
    acc = lax.fori_loop(0, n_chunks, body, jnp.zeros((1, LANES), jnp.float32),
                        unroll=unroll)
    out_ref[...] = acc.reshape(1, 1, LANES)


def _overall_bce_loss_impl(pred, target, *, compute_dtype=jnp.float32):
    """pred: (N,11) float logits; target: (N,11) any 0/1 (or soft) dtype."""
    n, c = pred.shape
    assert c == NUM_CATEGORIES and target.shape == pred.shape
    total = n * c

    if total % LANES == 0:
        # Free bitcast reshape: the kernel reads the original buffers, no copy.
        rows = total // LANES
        pred2 = pred.reshape(rows, LANES)
        tgt2 = target.reshape(rows, LANES)
    else:
        # Minimal (<128-element) pad to reach a lane-dense view.  Pad logits of
        # -1e9 with target 0 contribute exactly 0 loss -> no lane masking.
        rows = total // LANES + 1
        pad = rows * LANES - total
        pred2 = jnp.pad(pred.reshape(-1), (0, pad),
                        constant_values=jnp.asarray(PAD_LOGIT, pred.dtype)
                        ).reshape(rows, LANES)
        tgt2 = jnp.pad(target.reshape(-1), (0, pad)).reshape(rows, LANES)

    max_tile, vmem_limit = _tpu_tile_config()
    num_tiles = pl.cdiv(rows, max_tile)
    # Balanced tiles, rounded to the chunk size (itself a multiple of 8/32)
    # so the inner loop divides evenly; tiny inputs use one full-array block.
    tile_rows = min(rows, ((pl.cdiv(rows, num_tiles) + CHUNK_ROWS - 1)
                           // CHUNK_ROWS) * CHUNK_ROWS)
    num_tiles = pl.cdiv(rows, tile_rows)
    chunk_rows = CHUNK_ROWS if tile_rows % CHUNK_ROWS == 0 else tile_rows

    kernel = functools.partial(_overall_bce_kernel, valid_rows=rows,
                               chunk_rows=chunk_rows,
                               compute_dtype=compute_dtype)

    partials = pl.pallas_call(
        kernel,
        out_shape=jax.ShapeDtypeStruct((num_tiles, 1, LANES), jnp.float32),
        grid=(num_tiles,),
        in_specs=[
            pl.BlockSpec((tile_rows, LANES), lambda i: (i, 0)),
            pl.BlockSpec((tile_rows, LANES), lambda i: (i, 0)),
        ],
        out_specs=pl.BlockSpec((1, 1, LANES), lambda i: (i, 0, 0)),
        compiler_params=pltpu.CompilerParams(
            dimension_semantics=("parallel",),
            vmem_limit_bytes=vmem_limit,
        ),
    )(pred2, tgt2)

    # Tiny final reduction + single 1/(N*C) normalization.
    return jnp.sum(partials) * jnp.float32(1.0 / total)


overall_bce_loss = jax.jit(_overall_bce_loss_impl,
                           static_argnames=("compute_dtype",))


def _reference(pred, target):
    """PyTorch-faithful reference: sigmoid then BCE with -100 log clamp."""
    p = jax.nn.sigmoid(pred.astype(jnp.float32))
    t = target.astype(jnp.float32)
    log_p = jnp.maximum(jnp.log(p), -100.0)
    log_1mp = jnp.maximum(jnp.log(1.0 - p), -100.0)
    loss = -(t * log_p + (1.0 - t) * log_1mp)
    return jnp.mean(jnp.mean(loss, axis=0))


if __name__ == "__main__":
    key = jax.random.PRNGKey(0)

    def make_case(k, batch, pred_dtype, tgt_dtype):
        k1, k2 = jax.random.split(k)
        pred = (jax.random.normal(k1, (batch, NUM_CATEGORIES), jnp.float32)
                * 2.0).astype(pred_dtype)
        tgt = (jax.random.uniform(k2, (batch, NUM_CATEGORIES)) > 0.5
               ).astype(tgt_dtype)
        return pred, tgt

    key, k0, k1, k2, k3 = jax.random.split(key, 5)
    cases = [
        # (inputs, compute_dtype, atol, rtol)
        (make_case(k0, 8, jnp.float32, jnp.float32), jnp.float32, 1e-5, 1e-5),
        # narrow int8 target stream, non-multiple padding path
        (make_case(k1, 37, jnp.float32, jnp.int8), jnp.float32, 1e-5, 1e-5),
        # N % 128 == 0 -> zero-copy (bitcast) path, bf16 logits streamed as-is
        (make_case(k2, 256, jnp.bfloat16, jnp.float32), jnp.float32, 1e-5, 1e-5),
        # optional bf16 in-kernel math (v6e/v7x lever), looser tolerance
        (make_case(k3, 64, jnp.float32, jnp.float32), jnp.bfloat16, 3e-2, 3e-2),
    ]

    for (pred, tgt), cdt, atol, rtol in cases:
        loss = overall_bce_loss(pred, tgt, compute_dtype=cdt)
        jax.block_until_ready(loss)
        ref = _reference(pred, tgt)
        assert jnp.allclose(loss, ref, atol=atol, rtol=rtol), (
            pred.shape, pred.dtype, tgt.dtype, cdt, loss, ref)

    print("KERNEL_OK")
</pallas_src>

<mosaic_0001>
module attributes {stable_mosaic.version = 11 : i64} {
  func.func @_overall_bce_kernel(%arg0: i32, %arg1: memref<1x128xf32, #tpu.memory_space<vmem>>, %arg2: memref<1x128xf32, #tpu.memory_space<vmem>>, %arg3: memref<1x1x128xf32, #tpu.memory_space<vmem>>) attributes {dimension_semantics = [#tpu.dimension_semantics<parallel>], iteration_bounds = array<i64: 1>, scalar_prefetch = 0 : i64, scratch_operands = 0 : i64, tpu.core_type = #tpu.core_type<tc>, window_params = [{transform_indices = @transform_0, window_bounds = array<i64: 1, 128>}, {transform_indices = @transform_1, window_bounds = array<i64: 1, 128>}, {transform_indices = @transform_2, window_bounds = array<i64: 1, 1, 128>}]} {
    %c1_i32 = arith.constant 1 : i32
    %0 = arith.muli %arg0, %c1_i32 : i32
    %1 = tpu.iota {dimensions = array<i32: 0>} : vector<1x128xi32>
    %cst = arith.constant 0.000000e+00 : f32
    %2 = vector.broadcast %cst : f32 to vector<1x128xf32>
    %cst_0 = arith.constant 1.000000e+02 : f32
    %cst_1 = arith.constant 1.000000e+00 : f32
    %c0_i32 = arith.constant 0 : i32
    %c1_i32_2 = arith.constant 1 : i32
    %3 = arith.muli %c0_i32, %c1_i32_2 : i32
    %4 = tpu.assume_multiple %3, 1 : i32
    %5 = arith.index_cast %4 : i32 to index
    %c0 = arith.constant 0 : index
    %6 = vector.load %arg1[%5, %c0] : memref<1x128xf32, #tpu.memory_space<vmem>>, vector<1x128xf32>
    %7 = arith.index_cast %4 : i32 to index
    %c0_3 = arith.constant 0 : index
    %8 = vector.load %arg2[%7, %c0_3] : memref<1x128xf32, #tpu.memory_space<vmem>>, vector<1x128xf32>
    %9 = math.absf %6 : vector<1x128xf32>
    %cst_4 = arith.constant 0.000000e+00 : f32
    %10 = vector.broadcast %cst_4 : f32 to vector<1x128xf32>
    %11 = arith.subf %10, %9 : vector<1x128xf32>
    %12 = math.exp %11 : vector<1x128xf32>
    %13 = math.log1p %12 : vector<1x128xf32>
    %cst_5 = arith.constant 0.000000e+00 : f32
    %14 = vector.broadcast %cst_5 : f32 to vector<1x128xf32>
    %15 = arith.maximumf %6, %14 : vector<1x128xf32>
    %16 = arith.addf %15, %13 : vector<1x128xf32>
    %17 = arith.subf %16, %6 : vector<1x128xf32>
    %18 = vector.broadcast %cst_0 : f32 to vector<1x128xf32>
    %19 = arith.minimumf %17, %18 : vector<1x128xf32>
    %20 = arith.mulf %8, %19 : vector<1x128xf32>
    %21 = vector.broadcast %cst_1 : f32 to vector<1x128xf32>
    %22 = arith.subf %21, %8 : vector<1x128xf32>
    %23 = vector.broadcast %cst_0 : f32 to vector<1x128xf32>
    %24 = arith.minimumf %16, %23 : vector<1x128xf32>
    %25 = arith.mulf %22, %24 : vector<1x128xf32>
    %26 = arith.addf %20, %25 : vector<1x128xf32>
    %c1_i32_6 = arith.constant 1 : i32
    %27 = arith.muli %c0_i32, %c1_i32_6 : i32
    %28 = arith.addi %0, %27 : i32
    %29 = vector.broadcast %28 : i32 to vector<1x128xi32>
    %30 = arith.addi %29, %1 : vector<1x128xi32>
    %c1_i32_7 = arith.constant 1 : i32
    %31 = vector.broadcast %c1_i32_7 : i32 to vector<1x128xi32>
    %32 = arith.cmpi slt, %30, %31 : vector<1x128xi32>
    %cst_8 = arith.constant 0.000000e+00 : f32
    %33 = vector.broadcast %cst_8 : f32 to vector<1x128xf32>
    %34 = arith.select %32, %26, %33 : vector<1x128xi1>, vector<1x128xf32>
    %cst_9 = arith.constant dense<0.000000e+00> : vector<128xf32>
    %35 = vector.multi_reduction <add>, %34, %cst_9 [0] : vector<1x128xf32> to vector<128xf32>
    %36 = vector.shape_cast %35 : vector<128xf32> to vector<1x128xf32>
    %37 = arith.addf %2, %36 : vector<1x128xf32>
    %c1_i32_10 = arith.constant 1 : i32
    %38 = vector.shape_cast %37 : vector<1x128xf32> to vector<1x1x128xf32>
    %c0_11 = arith.constant 0 : index
    %c0_12 = arith.constant 0 : index
    %c0_13 = arith.constant 0 : index
    %39 = vector.load %arg3[%c0_11, %c0_12, %c0_13] : memref<1x1x128xf32, #tpu.memory_space<vmem>>, vector<1x1x128xf32>
    tpu.vector_store %arg3[%c0_11, %c0_12, %c0_13], %38 {strides = array<i32>} : memref<1x1x128xf32, #tpu.memory_space<vmem>>, vector<1x1x128xf32>,
    return
  }
  func.func @transform_0(%arg0: i32) -> (i32, i32) {
    %c0_i32 = arith.constant 0 : i32
    %c0_i32_0 = arith.constant 0 : i32
    return %arg0, %c0_i32 : i32, i32
  }
  func.func @transform_1(%arg0: i32) -> (i32, i32) {
    %c0_i32 = arith.constant 0 : i32
    %c0_i32_0 = arith.constant 0 : i32
    return %arg0, %c0_i32 : i32, i32
  }
  func.func @transform_2(%arg0: i32) -> (i32, i32, i32) {
    %c0_i32 = arith.constant 0 : i32
    %c0_i32_0 = arith.constant 0 : i32
    %c0_i32_1 = arith.constant 0 : i32
    return %arg0, %c0_i32, %c0_i32_0 : i32, i32, i32
  }
}

</mosaic_0001>

<llo_original>
// kernel: _overall_bce_loss_impl.1
$region0: #{_overall_bce_loss_impl.1}
  #allocation0 [shape = 'u32[]', space=smem, size = 0x4, offset = 0x4, fixed_abs, tag = 'smem constant byte address 0x4 - core index']
  #allocation1 [shape = 'u32[144,128]{1,0:T(1,128)}', space=vmem, size = 0x12000, scoped, tag = 'internal scratch']
  %s0 = inlined_call_operand.vmem [shape: f32[1,128], index: 0, kind: input, shape index: {}]
  %s1 = inlined_call_operand.vmem [shape: f32[1,128], index: 1, kind: input, shape index: {}]
  %s2 = inlined_call_operand.vmem [shape: f32[1,1,128], index: 2, kind: output, shape index: {}]
  %s3 = sld [smem:[#allocation0]]
  $region18: #{_overall_bce_loss_impl.1} parent=0
    _
  %s5 = ssub.s32 1, %s3
  %s6 = scalar_select 0, %s5, %s3
  // Predicated region
  $region2: #{_overall_bce_loss_impl.1} parent=0 // pred_check
    _
  $region3: #{_overall_bce_loss_impl.1} parent=0 // pred_check_branch
    %8 = sbr.rel (0) target = $region5
  $region4: #{_overall_bce_loss_impl.1} parent=0 // pred_region
    _
  $region5: #{_overall_bce_loss_impl.1} parent=0 // pred_fallthru
    _
  // Predicated region
  $region6: #{_overall_bce_loss_impl.1} parent=0 // pred_check
    _
  $region7: #{_overall_bce_loss_impl.1} parent=0 // pred_check_branch
    %10 = sbr.rel (0) target = $region9
  $region8: #{_overall_bce_loss_impl.1} parent=0 // pred_region
    _
  $region9: #{_overall_bce_loss_impl.1} parent=0 // pred_fallthru
    _
  %v11 = vlaneseq
  %v12 = vshrl.u32 %v11, 7
  %v13 = vld [vmem:[%s0] sm:$0x1]
  %v14 = vld [vmem:[%s1] sm:$0x1]
  %v15 = vand.u32 2147483647, %v13
  %v16 = vsub.f32 0.0, %v15
  %v17 = vmul.f32 %v16, 1.442695
  %v18 = vpow.pop %v17
  %v19 = vadd.f32 %v18, 1.0
  %v20 = vlog2.pop %v19
  %v21 = vmul.f32 %v20, 0.6931472
  %v22 = vmul.f32 -0.5, %v18
  %v23 = vadd.f32 %v22, 1.0
  %v24 = vmul.f32 %v23, %v18
  %v25 = vand.u32 2147483647, %v18
  %vm26 = vcmp.lt.f32.partialorder %v25, 0.0004427343
  %v27 = vsel %vm26, %v24, %v21
  %v28 = vmax.f32 %v13, 0.0
  %v29 = vadd.f32 %v28, %v27
  %v30 = vsub.f32 %v29, %v13
  %v31 = vmin.f32 %v30, 100.0
  %v32 = vmul.f32 %v14, %v31
  %v33 = vsub.f32 1.0, %v14
  %v34 = vmin.f32 %v29, 100.0
  %v35 = vmul.f32 %v33, %v34
  %v36 = vadd.f32 %v32, %v35
  %v37 = vstv 0
  %v38 = vadd.s32 %v37, %v12
  %vm39 = vcmp.lt.s32.totalorder %v38, 1
  %v40 = vsel %vm39, %v36, 0.0
  %v41 = vadd.f32 %v40, 0.0
  %v42 = vadd.f32 %v41, 0.0
  %43 = vst [vmem:[%s2] sm:$0x1] %v42
  // Predicated region
  $region10: #{_overall_bce_loss_impl.1} parent=0 // pred_check
    _
  $region11: #{_overall_bce_loss_impl.1} parent=0 // pred_check_branch
    %45 = sbr.rel (0) target = $region13
  $region12: #{_overall_bce_loss_impl.1} parent=0 // pred_region
    _
  $region13: #{_overall_bce_loss_impl.1} parent=0 // pred_fallthru
    _
  // Predicated region
  $region14: #{_overall_bce_loss_impl.1} parent=0 // pred_check
    _
  $region15: #{_overall_bce_loss_impl.1} parent=0 // pred_check_branch
    %47 = sbr.rel (0) target = $region17
  $region16: #{_overall_bce_loss_impl.1} parent=0 // pred_region
    _
  $region17: #{_overall_bce_loss_impl.1} parent=0 // pred_fallthru
    _

</llo_original>
